<compile_context>
chip_gen: v7x
topology: tpu7x:2x2x1
jax: 0.10.0
libtpu: 0.0.40
codegen_flags: <defaults>
</compile_context>

<pallas_src>
import jax
import jax.numpy as jnp
from jax.experimental import pallas as pl
from jax.experimental.pallas import tpu as pltpu

_MAX_OUTSTANDING_DMAS = 4


def _lane_dense_2d(total):
    """Pick a 2D (rows, width) view of `total` elements with a lane-dense
    (large multiple of 128) last dim whenever the element count allows."""
    for w in (4096, 2048, 1024, 512, 256, 128):
        if total % w == 0:
            return total // w, w
    # Odd sizes: single row.  Harmless here -- the copy is an HBM->HBM DMA, so
    # there is no VMEM tile or masked-store concern for this fallback.
    return 1, total


def _row_chunks(n_rows, itemsize):
    """Split rows into <= _MAX_OUTSTANDING_DMAS contiguous (start, size) chunks,
    aligned to the sublane packing (except possibly the last chunk)."""
    pack = 8 * max(1, 4 // max(1, itemsize))        # rows per (8,128) tile
    n_chunks = min(_MAX_OUTSTANDING_DMAS, max(1, n_rows // pack))
    rows = -(-n_rows // n_chunks)                   # ceil divide
    rows = -(-rows // pack) * pack                  # round up to pack multiple
    chunks = []
    start = 0
    while start < n_rows:
        size = min(rows, n_rows - start)
        chunks.append((start, size))
        start += size
    return tuple(chunks)


def _make_dma_copy_kernel(row_chunks):
    """Kernel: issue all HBM->HBM DMAs (multiple outstanding), then wait."""
    n = len(row_chunks)

    def kernel(x_hbm, o_hbm, sem):
        copies = []
        for idx, (start, size) in enumerate(row_chunks):
            cp = pltpu.make_async_copy(
                x_hbm.at[pl.ds(start, size)],
                o_hbm.at[pl.ds(start, size)],
                sem.at[idx],
            )
            cp.start()
            copies.append(cp)
        for cp in copies:
            cp.wait()

    return kernel, n


def pixel_unshuffle_1d(x, downscale_factor):
    """Pallas implementation of PixelUnshuffle1D.forward (contiguous reshape,
    materialized via a zero-VMEM HBM->HBM DMA copy)."""
    B, C, L = x.shape
    r = int(downscale_factor)
    if L % r != 0:
        raise ValueError("Input token length must be divisible by downscale factor")
    Lo = L // r
    Co = C * r

    total = B * C * L
    itemsize = jnp.dtype(x.dtype).itemsize
    M, W = _lane_dense_2d(total)
    chunks = _row_chunks(M, itemsize)
    kernel, n_sems = _make_dma_copy_kernel(chunks)

    # Metadata-level reshape to a lane-dense 2D slab; the unshuffle itself
    # carries no index math beyond this.
    x2 = jnp.reshape(x, (M, W))

    out2 = pl.pallas_call(
        kernel,
        out_shape=jax.ShapeDtypeStruct((M, W), x.dtype),
        in_specs=[pl.BlockSpec(memory_space=pl.ANY)],    # stay in HBM, no auto-DMA
        out_specs=pl.BlockSpec(memory_space=pl.ANY),
        scratch_shapes=[pltpu.SemaphoreType.DMA((n_sems,))],
        cost_estimate=pl.CostEstimate(
            flops=0,
            transcendentals=0,
            bytes_accessed=2 * total * itemsize,
        ),
    )(x2)

    return jnp.reshape(out2, (B, Co, Lo))


def pixel_unshuffle_1d_ref(x, downscale_factor):
    """Plain-JAX reference (and zero-copy fast path) matching torch.reshape."""
    B, C, L = x.shape
    r = int(downscale_factor)
    return jnp.reshape(x, (B, C * r, L // r))


if __name__ == "__main__":
    key = jax.random.PRNGKey(0)

    # Small shape implied by the module (batch=2, channels=4, tokens=16).
    B, C, L = 2, 4, 16
    downscale_factor = 2
    x = jax.random.normal(key, (B, C, L), dtype=jnp.float32)

    y = jax.block_until_ready(pixel_unshuffle_1d(x, downscale_factor))
    y_ref = pixel_unshuffle_1d_ref(x, downscale_factor)
    assert y.shape == (B, C * downscale_factor, L // downscale_factor), y.shape
    assert jnp.array_equal(y, y_ref), "Pallas output mismatch vs reference reshape"

    # Moderate shape that exercises the multi-DMA (4 outstanding copies) path.
    B2, C2, L2, r2 = 2, 256, 2048, 2
    x_big = jax.random.normal(jax.random.PRNGKey(0), (B2, C2, L2), dtype=jnp.float32)
    y_big = jax.block_until_ready(pixel_unshuffle_1d(x_big, r2))
    assert jnp.array_equal(y_big, pixel_unshuffle_1d_ref(x_big, r2)), \
        "Pallas output mismatch on multi-DMA path"

    print("KERNEL_OK")
</pallas_src>

<mosaic_0001>
module attributes {stable_mosaic.version = 11 : i64} {
  func.func @kernel(%arg0: memref<1x128xf32, #tpu.memory_space<any>>, %arg1: memref<1x128xf32, #tpu.memory_space<any>>, %arg2: memref<1x!tpu.dma_semaphore, #tpu.memory_space<semaphore_mem>>) attributes {dimension_semantics = [], scalar_prefetch = 0 : i64, scratch_operands = 1 : i64, tpu.core_type = #tpu.core_type<tc>} {
    %c0_i32 = arith.constant 0 : i32
    %c0_i32_0 = arith.constant 0 : i32
    %c0_i32_1 = arith.constant 0 : i32
    %0 = tpu.memref_slice %arg0[%c0_i32_0, %c0_i32_1] : memref<1x128xf32, #tpu.memory_space<any>> -> memref<1x128xf32, #tpu.memory_space<any>>
    %c0_i32_2 = arith.constant 0 : i32
    %c0_i32_3 = arith.constant 0 : i32
    %1 = tpu.memref_slice %arg1[%c0_i32_2, %c0_i32_3] : memref<1x128xf32, #tpu.memory_space<any>> -> memref<1x128xf32, #tpu.memory_space<any>>
    %2 = tpu.memref_slice %arg2[%c0_i32] : memref<1x!tpu.dma_semaphore, #tpu.memory_space<semaphore_mem>> -> memref<1x!tpu.dma_semaphore, #tpu.memory_space<semaphore_mem>>
    %3 = tpu.memref_squeeze %2 : memref<1x!tpu.dma_semaphore, #tpu.memory_space<semaphore_mem>> -> memref<!tpu.dma_semaphore, #tpu.memory_space<semaphore_mem>>
    tpu.enqueue_dma source(%0 : memref<1x128xf32, #tpu.memory_space<any>>) target(%1 : memref<1x128xf32, #tpu.memory_space<any>>) target_semaphore(%3 : memref<!tpu.dma_semaphore, #tpu.memory_space<semaphore_mem>>)
    %c0_i32_4 = arith.constant 0 : i32
    %c0_i32_5 = arith.constant 0 : i32
    %c0_i32_6 = arith.constant 0 : i32
    %4 = tpu.memref_slice %arg0[%c0_i32_5, %c0_i32_6] : memref<1x128xf32, #tpu.memory_space<any>> -> memref<1x128xf32, #tpu.memory_space<any>>
    %c0_i32_7 = arith.constant 0 : i32
    %c0_i32_8 = arith.constant 0 : i32
    %5 = tpu.memref_slice %arg1[%c0_i32_7, %c0_i32_8] : memref<1x128xf32, #tpu.memory_space<any>> -> memref<1x128xf32, #tpu.memory_space<any>>
    %6 = tpu.memref_slice %arg2[%c0_i32_4] : memref<1x!tpu.dma_semaphore, #tpu.memory_space<semaphore_mem>> -> memref<1x!tpu.dma_semaphore, #tpu.memory_space<semaphore_mem>>
    %7 = tpu.memref_squeeze %6 : memref<1x!tpu.dma_semaphore, #tpu.memory_space<semaphore_mem>> -> memref<!tpu.dma_semaphore, #tpu.memory_space<semaphore_mem>>
    tpu.wait_dma2 semaphore(%7 : memref<!tpu.dma_semaphore, #tpu.memory_space<semaphore_mem>>) src(%4 : memref<1x128xf32, #tpu.memory_space<any>>) dst(%5 : memref<1x128xf32, #tpu.memory_space<any>>)
    return
  }
}

</mosaic_0001>

<llo_original>
// kernel: tpu_custom_call.1
$region0: #{tpu_custom_call.1}
  #allocation0 [shape = 'u32[]', space=smem, size = 0x4, offset = 0x4, fixed_abs, tag = 'smem constant byte address 0x4 - core index']
  #allocation1 [shape = 'u32[144,128]{1,0:T(1,128)}', space=vmem, size = 0x12000, scoped, tag = 'internal scratch']
  #allocation2 [shape = 's32[1]{0}', space=sflag, size = 0x4, scoped, tag = 'scratch operand']
  #allocation3 [shape = 's32[]', space=sflag, size = 0x4, offset = 0, fixed_abs, tag = 'sflag constant byte address 0x0 - dummy sync flag']
  #allocation4 [shape = 'u32[0]{0}', space=smem, size = 0, offset = 0, fixed_abs, tag = 'smem constant byte address 0x0 - null']
  %s0 = inlined_call_operand.hbm [shape: f32[1,128], index: 0, kind: input, shape index: {}]
  %s1 = inlined_call_operand.hbm [shape: f32[1,128], index: 1, kind: output, shape index: {}]
  %s2 = sld [smem:[#allocation0]]
  $region2: #{tpu_custom_call.1} parent=0
    _
  %s4 = ssub.s32 1, %s2
  %s5 = scalar_select 0, %s4, %s2
  %s7 = sshll.u32 1, 14
  %s8 = sxor.u32 4294967295, %s7
  %s11 = sshll.u32 3, 24
  %s12 = sxor.u32 4294967295, %s11
  %s13 = sand.u32 0, %s12
  %s15 = sor.u32 %s13, 0
  %18 = dma.general %s0, 16, %s1, [#allocation2], [#allocation3], [#allocation4], %s15, 0
  %s19 = smul.u32 1, 1
  %s20 = sshll.u32 %s19, 4
  %21 = dma.done [#allocation2], %s20
  %22 = vsyncmov [#allocation2]
  %s23 = vpop.sfrf %22
  %p24 = scmp.eq.s32.totalorder %s23, 0
  %p25 = pneg %p24
  %27 = shalt.err (%p25)

</llo_original>
